<compile_context>
chip_gen: v7x
topology: tpu7x:2x2x1
jax: 0.10.0
libtpu: 0.0.40
codegen_flags: <defaults>
</compile_context>

<pallas_src>
import jax
import jax.numpy as jnp
from jax.experimental import pallas as pl
from jax.experimental.pallas import tpu as pltpu


def _round_up(x: int, m: int) -> int:
    return ((x + m - 1) // m) * m


def _nsp_head_kernel(x_ref, w_ref, b_ref, o_ref):
    # x_ref: [TB, H], w_ref: [H, 2], b_ref: [1, 2], o_ref: [TB, 2]
    acc = jnp.dot(x_ref[...], w_ref[...], preferred_element_type=jnp.float32)
    acc = acc + b_ref[...]                    # f32 bias broadcast over batch tile
    o_ref[...] = acc.astype(o_ref.dtype)


def bert_only_nsp_head(pooled_output, weight, bias, *, tb=None,
                       vmem_limit_bytes=48 * 1024 * 1024):
    """pooled_output: [B, H]; weight: [2, H] (PyTorch layout); bias: [2]."""
    B, H = pooled_output.shape
    dtype = pooled_output.dtype
    dtype_bytes = jnp.dtype(dtype).itemsize
    # Sublane tile for the second-to-last block dim: 8 (f32), 16 (bf16), 32 (int8).
    sublane = max(8, 32 // dtype_bytes)

    if tb is None:
        # Keep each x tile <= ~8 MiB so the double-buffered pair stays ~16 MiB,
        # comfortably under the scoped-VMEM budget on v5e/v6e/v7x.
        per_buf_budget = 8 * 1024 * 1024
        cap = max(sublane, (per_buf_budget // max(1, H * dtype_bytes))
                  // sublane * sublane)
        tb = min(2048, cap, _round_up(B, sublane))
        tb = max(tb, sublane)

    # Pad batch so TB divides it exactly (pad rows are zeros, sliced off below).
    B_pad = _round_up(B, tb)
    x = pooled_output
    if B_pad != B:
        x = jnp.pad(x, ((0, B_pad - B), (0, 0)))

    # Pre-transpose the (tiny) weight to [H, 2]; keep it in the input dtype so
    # a bf16 x goes straight to the bf16 MXU path. Bias stays f32 for the add.
    w_t = weight.T.astype(dtype)              # [H, 2]
    b2d = bias.reshape(1, 2).astype(jnp.float32)

    grid = (B_pad // tb,)

    out = pl.pallas_call(
        _nsp_head_kernel,
        out_shape=jax.ShapeDtypeStruct((B_pad, 2), dtype),
        grid_spec=pltpu.PrefetchScalarGridSpec(
            num_scalar_prefetch=0,
            grid=grid,
            in_specs=[
                # x: streamed per batch tile (double-buffered by Pallas).
                pl.BlockSpec((tb, H), lambda i: (i, 0)),
                # weight / bias: constant block index -> fetched once, resident.
                pl.BlockSpec((H, 2), lambda i: (0, 0)),
                pl.BlockSpec((1, 2), lambda i: (0, 0)),
            ],
            out_specs=pl.BlockSpec((tb, 2), lambda i: (i, 0)),
        ),
        compiler_params=pltpu.CompilerParams(
            # Batch tiles are independent -> parallel (sharded across TCs on v7x).
            dimension_semantics=("parallel",),
            # Above v5e's 16 MiB default, below v7x's 64 MiB physical VMEM.
            vmem_limit_bytes=vmem_limit_bytes,
        ),
        cost_estimate=pl.CostEstimate(
            flops=2 * B_pad * H * 2,
            transcendentals=0,
            bytes_accessed=(B_pad * H + H * 2 + 2 + B_pad * 2) * dtype_bytes,
        ),
    )(x, w_t, b2d)

    if B_pad != B:
        out = out[:B]
    return out


if __name__ == "__main__":
    key = jax.random.PRNGKey(0)
    k_x, k_w, k_b, k_x2 = jax.random.split(key, 4)

    # Small, deterministic config: batch=8, hidden=32 (single tile path).
    B, H = 8, 32
    pooled_output = jax.random.normal(k_x, (B, H), dtype=jnp.float32)
    # nn.Linear(hidden_size, 2): weight [2, H], bias [2]
    weight = jax.random.normal(k_w, (2, H), dtype=jnp.float32) * 0.02
    bias = jax.random.normal(k_b, (2,), dtype=jnp.float32) * 0.02

    scores = bert_only_nsp_head(pooled_output, weight, bias)
    jax.block_until_ready(scores)
    ref = pooled_output @ weight.T + bias
    assert scores.shape == (B, 2)
    assert jnp.allclose(scores, ref, atol=1e-5, rtol=1e-5)

    # Exercise the tiled + padded path: B=20 not a multiple of TB=8 -> pad to 24,
    # grid of 3 batch tiles.
    B2 = 20
    pooled_output2 = jax.random.normal(k_x2, (B2, H), dtype=jnp.float32)
    scores2 = bert_only_nsp_head(pooled_output2, weight, bias, tb=8)
    jax.block_until_ready(scores2)
    ref2 = pooled_output2 @ weight.T + bias
    assert scores2.shape == (B2, 2)
    assert jnp.allclose(scores2, ref2, atol=1e-5, rtol=1e-5)

    print("KERNEL_OK")
</pallas_src>

<mosaic_0001>
module attributes {stable_mosaic.version = 11 : i64} {
  func.func @_nsp_head_kernel(%arg0: i32, %arg1: memref<8x32xf32, #tpu.memory_space<vmem>>, %arg2: memref<32x2xf32, #tpu.memory_space<vmem>>, %arg3: memref<1x2xf32, #tpu.memory_space<vmem>>, %arg4: memref<8x2xf32, #tpu.memory_space<vmem>>) attributes {dimension_semantics = [#tpu.dimension_semantics<parallel>], iteration_bounds = array<i64: 1>, scalar_prefetch = 0 : i64, scratch_operands = 0 : i64, tpu.core_type = #tpu.core_type<tc>, window_params = [{transform_indices = @transform_0, window_bounds = array<i64: 8, 32>}, {pipeline_mode = #tpu.pipeline_mode<synchronous>, transform_indices = @transform_1, window_bounds = array<i64: 32, 2>}, {pipeline_mode = #tpu.pipeline_mode<synchronous>, transform_indices = @transform_2, window_bounds = array<i64: 1, 2>}, {transform_indices = @transform_3, window_bounds = array<i64: 8, 2>}]} {
    %c0 = arith.constant 0 : index
    %c0_0 = arith.constant 0 : index
    %0 = vector.load %arg1[%c0, %c0_0] : memref<8x32xf32, #tpu.memory_space<vmem>>, vector<8x32xf32>
    %c0_1 = arith.constant 0 : index
    %c0_2 = arith.constant 0 : index
    %1 = vector.load %arg2[%c0_1, %c0_2] : memref<32x2xf32, #tpu.memory_space<vmem>>, vector<32x2xf32>
    %cst = arith.constant dense<0.000000e+00> : vector<8x2xf32>
    %2 = tpu.matmul %0, %1, %cst {dimension_numbers = #tpu.dot_dimension_numbers<[1], [0], [0], [1], [0, 0, 1, 1], [], []>} : vector<8x32xf32>, vector<32x2xf32>, vector<8x2xf32> -> vector<8x2xf32>
    %c0_3 = arith.constant 0 : index
    %c0_4 = arith.constant 0 : index
    %3 = vector.load %arg3[%c0_3, %c0_4] : memref<1x2xf32, #tpu.memory_space<vmem>>, vector<1x2xf32>
    %4 = vector.broadcast %3 : vector<1x2xf32> to vector<8x2xf32>
    %5 = arith.addf %2, %4 : vector<8x2xf32>
    %c0_5 = arith.constant 0 : index
    %c0_6 = arith.constant 0 : index
    %6 = vector.load %arg4[%c0_5, %c0_6] : memref<8x2xf32, #tpu.memory_space<vmem>>, vector<8x2xf32>
    tpu.vector_store %arg4[%c0_5, %c0_6], %5 {strides = array<i32>} : memref<8x2xf32, #tpu.memory_space<vmem>>, vector<8x2xf32>,
    return
  }
  func.func @transform_0(%arg0: i32) -> (i32, i32) {
    %c0_i32 = arith.constant 0 : i32
    %c0_i32_0 = arith.constant 0 : i32
    return %arg0, %c0_i32 : i32, i32
  }
  func.func @transform_1(%arg0: i32) -> (i32, i32) {
    %c0_i32 = arith.constant 0 : i32
    %c0_i32_0 = arith.constant 0 : i32
    %c0_i32_1 = arith.constant 0 : i32
    return %c0_i32, %c0_i32_0 : i32, i32
  }
  func.func @transform_2(%arg0: i32) -> (i32, i32) {
    %c0_i32 = arith.constant 0 : i32
    %c0_i32_0 = arith.constant 0 : i32
    %c0_i32_1 = arith.constant 0 : i32
    return %c0_i32, %c0_i32_0 : i32, i32
  }
  func.func @transform_3(%arg0: i32) -> (i32, i32) {
    %c0_i32 = arith.constant 0 : i32
    %c0_i32_0 = arith.constant 0 : i32
    return %arg0, %c0_i32 : i32, i32
  }
}

</mosaic_0001>

<llo_original>
// kernel: tpu_custom_call.1
$region0: #{tpu_custom_call.1}
  #allocation0 [shape = 'u32[]', space=smem, size = 0x4, offset = 0x4, fixed_abs, tag = 'smem constant byte address 0x4 - core index']
  #allocation1 [shape = 'u32[144,128]{1,0:T(1,128)}', space=vmem, size = 0x12000, scoped, tag = 'internal scratch']
  %s0 = inlined_call_operand.vmem [shape: f32[8,32], index: 0, kind: input, shape index: {}]
  %s1 = inlined_call_operand.vmem [shape: f32[32,2], index: 1, kind: input, shape index: {}]
  %s2 = inlined_call_operand.vmem [shape: f32[1,2], index: 2, kind: input, shape index: {}]
  %s3 = inlined_call_operand.vmem [shape: f32[8,2], index: 3, kind: output, shape index: {}]
  %s4 = sld [smem:[#allocation0]]
  $region22: #{tpu_custom_call.1} parent=0
    _
  %s6 = ssub.s32 1, %s4
  %s7 = scalar_select 0, %s6, %s4
  // Predicated region
  $region2: #{tpu_custom_call.1} parent=0 // pred_check
    _
  $region3: #{tpu_custom_call.1} parent=0 // pred_check_branch
    %9 = sbr.rel (0) target = $region5
  $region4: #{tpu_custom_call.1} parent=0 // pred_region
    _
  $region5: #{tpu_custom_call.1} parent=0 // pred_fallthru
    _
  // Predicated region
  $region6: #{tpu_custom_call.1} parent=0 // pred_check
    _
  $region7: #{tpu_custom_call.1} parent=0 // pred_check_branch
    %11 = sbr.rel (0) target = $region9
  $region8: #{tpu_custom_call.1} parent=0 // pred_region
    _
  $region9: #{tpu_custom_call.1} parent=0 // pred_fallthru
    _
  // Predicated region
  $region10: #{tpu_custom_call.1} parent=0 // pred_check
    _
  $region11: #{tpu_custom_call.1} parent=0 // pred_check_branch
    %13 = sbr.rel (0) target = $region13
  $region12: #{tpu_custom_call.1} parent=0 // pred_region
    _
  $region13: #{tpu_custom_call.1} parent=0 // pred_fallthru
    _
  %v14 = vld [vmem:[%s0] sm:$0xff]
  %v15 = vld [vmem:[%s1] sm:$0xff]
  %v16 = vld [vmem:[%s1 + $0x8] sm:$0xff]
  %v17 = vld [vmem:[%s1 + $0x10] sm:$0xff]
  %v18 = vld [vmem:[%s1 + $0x18] sm:$0xff]
  %v19 = vld [vmem:[%s2] sm:$0x1]
  %v21 = vlaneseq
  %v22 = vshrl.u32 %v21, 7
  %v23 = vsub.s32 0, %v22
  %v24 = vrot.slane %v19, %v23
  %vm26 = vcmask 261120
  %v28 = vsel %vm26, %v14, 0
  %30 = vmatprep.subr.mxu0 0.0
  %31 = vmatpush1.msra.mxu0 %v15
  %32 = vmatprep.subr.mxu0 0.0
  %33 = vmatpush1.msra.mxu0 %v16
  %34 = vmatprep.subr.mxu0 0.0
  %35 = vmatpush1.msra.mxu0 %v17
  %36 = vmatprep.subr.mxu0 0.0
  %37 = vmatpush1.msra.mxu0 %v18
  %38 = vmatprep.subr.mxu0 0.0
  %39 = vmatpush1.msra.mxu0 0.0
  %40 = vmatprep.subr.mxu0 0.0
  %41 = vmatpush1.msra.mxu0 0.0
  %42 = vmatprep.subr.mxu0 0.0
  %43 = vmatpush1.msra.mxu0 0.0
  %44 = vmatprep.subr.mxu0 0.0
  %45 = vmatpush1.msra.mxu0 0.0
  %46 = vmatprep.subr.mxu0 0.0
  %47 = vmatpush1.msra.mxu0 0.0
  %48 = vmatprep.subr.mxu0 0.0
  %49 = vmatpush1.msra.mxu0 0.0
  %50 = vmatprep.subr.mxu0 0.0
  %51 = vmatpush1.msra.mxu0 0.0
  %52 = vmatprep.subr.mxu0 0.0
  %53 = vmatpush1.msra.mxu0 0.0
  %54 = vmatprep.subr.mxu0 0.0
  %55 = vmatpush1.msra.mxu0 0.0
  %56 = vmatprep.subr.mxu0 0.0
  %57 = vmatpush1.msra.mxu0 0.0
  %58 = vmatprep.subr.mxu0 0.0
  %59 = vmatpush1.msra.mxu0 0.0
  %60 = vmatprep.subr.mxu0 0.0
  %61 = vmatpush1.msra.mxu0 0.0
  %62 = vmatprep.subr.mxu0 0.0
  %63 = vmatpush1.msra.mxu0 0.0
  %64 = vmatprep.subr.mxu0 0.0
  %65 = vmatpush1.msra.mxu0 0.0
  %66 = vmatprep.subr.mxu0 0.0
  %67 = vmatpush1.msra.mxu0 0.0
  %68 = vmatprep.subr.mxu0 0.0
  %69 = vmatpush1.msra.mxu0 0.0
  %70 = vmatprep.subr.mxu0 0.0
  %71 = vmatpush1.msra.mxu0 0.0
  %72 = vmatprep.subr.mxu0 0.0
  %73 = vmatpush1.msra.mxu0 0.0
  %74 = vmatprep.subr.mxu0 0.0
  %75 = vmatpush1.msra.mxu0 0.0
  %76 = vmatprep.subr.mxu0 0.0
  %77 = vmatpush1.msra.mxu0 0.0
  %78 = vmatprep.subr.mxu0 0.0
  %79 = vmatpush1.msra.mxu0 0.0
  %80 = vmatprep.subr.mxu0 0.0
  %81 = vmatpush1.msra.mxu0 0.0
  %82 = vmatprep.subr.mxu0 0.0
  %83 = vmatpush1.msra.mxu0 0.0
  %84 = vmatprep.subr.mxu0 0.0
  %85 = vmatpush1.msra.mxu0 0.0
  %86 = vmatprep.subr.mxu0 0.0
  %87 = vmatpush1.msra.mxu0 0.0
  %88 = vmatprep.subr.mxu0 0.0
  %89 = vmatpush1.msra.mxu0 0.0
  %90 = vmatprep.subr.mxu0 0.0
  %91 = vmatpush1.msra.mxu0 0.0
  %92 = vmatprep.subr.mxu0 0.0
  %93 = vmatpush1.msra.mxu0 0.0
  %94 = vmatprep.mubr.f32.mxu0 0.0
  %95 = vmatmul.mubr.f32.gmra.mrb[0].mxu0 %v28
  %v96 = vpop.f32.mrb[0].mxu0
  %v97 = vadd.f32 %v24, %v96
  %v98 = vpop.f32.mrb[0].mxu0
  %99 = vdwg.mxu0
  %vm100 = vcmask 15360
  %101 = vst.msk [vmem:[%s3] sm:$0xff] %vm100, %v97
  // Predicated region
  $region14: #{tpu_custom_call.1} parent=0 // pred_check
    _
  $region15: #{tpu_custom_call.1} parent=0 // pred_check_branch
    %103 = sbr.rel (0) target = $region17
  $region16: #{tpu_custom_call.1} parent=0 // pred_region
    _
  $region17: #{tpu_custom_call.1} parent=0 // pred_fallthru
    _
  // Predicated region
  $region18: #{tpu_custom_call.1} parent=0 // pred_check
    _
  $region19: #{tpu_custom_call.1} parent=0 // pred_check_branch
    %105 = sbr.rel (0) target = $region21
  $region20: #{tpu_custom_call.1} parent=0 // pred_region
    _
  $region21: #{tpu_custom_call.1} parent=0 // pred_fallthru
    _

</llo_original>
